<compile_context>
chip_gen: v7x
topology: tpu7x:2x2x1
jax: 0.10.0
libtpu: 0.0.40
codegen_flags: <defaults>
</compile_context>

<pallas_src>
import functools
import math

import jax
import jax.numpy as jnp
from jax.experimental import pallas as pl
from jax.experimental.pallas import tpu as pltpu


def rnn_kernel(x_ref, h0_ref, wih_ref, whh_ref, b_ref, wfc_ref, bfc_ref,
               out_ref, hid_ref):
    """Whole sequence in one invocation; recurrence is an in-kernel loop."""
    T, Bp, Ip = x_ref.shape
    Hp = whh_ref.shape[0]

    # Hoisted input projection: one big MXU matmul instead of T tiny ones.
    # (T*Bp, Ip) @ (Ip, Hp) + (b_ih + b_hh)  ->  (T, Bp, Hp)
    x_all = x_ref[...].reshape(T * Bp, Ip)
    x_proj = (jnp.dot(x_all, wih_ref[...], preferred_element_type=jnp.float32)
              + b_ref[...]).reshape(T, Bp, Hp)

    whh = whh_ref[...]
    h = h0_ref[...]

    # Serial recurrence: only h @ W_hh^T + tanh remains on the critical path.
    # T is a small static trip count, so a fully unrolled loop is fine.
    for t in range(T):
        h = jnp.tanh(x_proj[t]
                     + jnp.dot(h, whh, preferred_element_type=jnp.float32))

    hid_ref[...] = h.astype(hid_ref.dtype)

    # fc + log_softmax on the last hidden state (padded O columns carry
    # bias -1e30 -> exp underflows to 0 and they do not perturb the real ones).
    logits = (jnp.dot(h, wfc_ref[...], preferred_element_type=jnp.float32)
              + bfc_ref[...])
    m = jnp.max(logits, axis=-1, keepdims=True)
    shifted = logits - m
    lse = jnp.log(jnp.sum(jnp.exp(shifted), axis=-1, keepdims=True))
    out_ref[...] = (shifted - lse).astype(out_ref.dtype)


def _round_up(n, m):
    return ((n + m - 1) // m) * m


@functools.partial(jax.jit, static_argnames=())
def nn_rnn_forward(x, h0, w_ih, w_hh, b_ih, b_hh, w_fc, b_fc):
    """x: (B, T, I); h0: (1, B, H).  Returns (log_probs (B, O), hidden (1, B, H))."""
    B, T, I = x.shape
    H = w_hh.shape[0]
    O = w_fc.shape[0]

    # Pad to (8, 128)-friendly shapes so all kernel ops are lane-dense.
    Bp = _round_up(max(B, 8), 8)
    Ip = _round_up(I, 128)
    Hp = _round_up(H, 128)
    Op = _round_up(O, 128)

    # Timestep-major input (T, Bp, Ip), zero-padded.
    x_tbi = jnp.transpose(x, (1, 0, 2)).astype(jnp.float32)
    x_p = jnp.zeros((T, Bp, Ip), jnp.float32).at[:, :B, :I].set(x_tbi)

    h0_p = jnp.zeros((Bp, Hp), jnp.float32).at[:B, :H].set(h0[0].astype(jnp.float32))
    wih_p = jnp.zeros((Ip, Hp), jnp.float32).at[:I, :H].set(w_ih.T)        # W_ih^T
    whh_p = jnp.zeros((Hp, Hp), jnp.float32).at[:H, :H].set(w_hh.T)        # W_hh^T
    b_p = jnp.zeros((1, Hp), jnp.float32).at[0, :H].set(b_ih + b_hh)       # fused bias
    wfc_p = jnp.zeros((Hp, Op), jnp.float32).at[:H, :O].set(w_fc.T)        # W_fc^T
    # Padded fc-bias columns get -1e30 so padded logits drop out of log_softmax.
    bfc_p = jnp.full((1, Op), -1e30, jnp.float32).at[0, :O].set(b_fc)

    out_p, hid_p = pl.pallas_call(
        rnn_kernel,
        out_shape=(jax.ShapeDtypeStruct((Bp, Op), jnp.float32),
                   jax.ShapeDtypeStruct((Bp, Hp), jnp.float32)),
    )(x_p, h0_p, wih_p, whh_p, b_p, wfc_p, bfc_p)

    out = out_p[:B, :O].astype(x.dtype)
    hid = hid_p[:B, :H].astype(x.dtype)
    return out, hid[None, :, :]


def init_params(key, input_size, hidden_size, output_size):
    """Deterministic PyTorch-style uniform init: U(-1/sqrt(H), 1/sqrt(H))."""
    ks = jax.random.split(key, 6)
    k_rnn = 1.0 / math.sqrt(hidden_size)
    k_fc = 1.0 / math.sqrt(hidden_size)
    w_ih = jax.random.uniform(ks[0], (hidden_size, input_size), jnp.float32, -k_rnn, k_rnn)
    w_hh = jax.random.uniform(ks[1], (hidden_size, hidden_size), jnp.float32, -k_rnn, k_rnn)
    b_ih = jax.random.uniform(ks[2], (hidden_size,), jnp.float32, -k_rnn, k_rnn)
    b_hh = jax.random.uniform(ks[3], (hidden_size,), jnp.float32, -k_rnn, k_rnn)
    w_fc = jax.random.uniform(ks[4], (output_size, hidden_size), jnp.float32, -k_fc, k_fc)
    b_fc = jax.random.uniform(ks[5], (output_size,), jnp.float32, -k_fc, k_fc)
    return w_ih, w_hh, b_ih, b_hh, w_fc, b_fc


def reference_forward(x, h0, w_ih, w_hh, b_ih, b_hh, w_fc, b_fc):
    """Pure-JAX reference (mirrors torch nn.RNN + Linear + LogSoftmax)."""
    B, T, I = x.shape
    h = h0[0]
    for t in range(T):
        h = jnp.tanh(x[:, t, :] @ w_ih.T + b_ih + h @ w_hh.T + b_hh)
    logits = h @ w_fc.T + b_fc
    log_probs = logits - jax.scipy.special.logsumexp(logits, axis=-1, keepdims=True)
    return log_probs, h[None]


if __name__ == "__main__":
    B, T, I, H, O = 2, 8, 16, 32, 10

    key = jax.random.PRNGKey(0)
    k_x, k_p = jax.random.split(key)
    x = jax.random.normal(k_x, (B, T, I), jnp.float32)
    h0 = jnp.zeros((1, B, H), jnp.float32)          # init_hidden()
    params = init_params(k_p, I, H, O)

    out, hid = nn_rnn_forward(x, h0, *params)
    out, hid = jax.block_until_ready((out, hid))

    ref_out, ref_hid = reference_forward(x, h0, *params)
    assert out.shape == (B, O) and hid.shape == (1, B, H)
    assert jnp.allclose(out, ref_out, atol=1e-5, rtol=1e-5)
    assert jnp.allclose(hid, ref_hid, atol=1e-5, rtol=1e-5)

    print("KERNEL_OK")
</pallas_src>

<mosaic_0001>
module attributes {stable_mosaic.version = 11 : i64} {
  func.func @rnn_kernel(%arg0: memref<8x8x128xf32, #tpu.memory_space<vmem>>, %arg1: memref<8x128xf32, #tpu.memory_space<vmem>>, %arg2: memref<128x128xf32, #tpu.memory_space<vmem>>, %arg3: memref<128x128xf32, #tpu.memory_space<vmem>>, %arg4: memref<1x128xf32, #tpu.memory_space<vmem>>, %arg5: memref<128x128xf32, #tpu.memory_space<vmem>>, %arg6: memref<1x128xf32, #tpu.memory_space<vmem>>, %arg7: memref<8x128xf32, #tpu.memory_space<vmem>>, %arg8: memref<8x128xf32, #tpu.memory_space<vmem>>) attributes {dimension_semantics = [], scalar_prefetch = 0 : i64, scratch_operands = 0 : i64, tpu.core_type = #tpu.core_type<tc>} {
    %c0 = arith.constant 0 : index
    %c0_0 = arith.constant 0 : index
    %c0_1 = arith.constant 0 : index
    %0 = vector.load %arg0[%c0, %c0_0, %c0_1] : memref<8x8x128xf32, #tpu.memory_space<vmem>>, vector<8x8x128xf32>
    %1 = vector.shape_cast %0 : vector<8x8x128xf32> to vector<64x128xf32>
    %c0_2 = arith.constant 0 : index
    %c0_3 = arith.constant 0 : index
    %2 = vector.load %arg2[%c0_2, %c0_3] : memref<128x128xf32, #tpu.memory_space<vmem>>, vector<128x128xf32>
    %cst = arith.constant dense<0.000000e+00> : vector<64x128xf32>
    %3 = tpu.matmul %1, %2, %cst {dimension_numbers = #tpu.dot_dimension_numbers<[1], [0], [0], [1], [0, 0, 1, 1], [], []>} : vector<64x128xf32>, vector<128x128xf32>, vector<64x128xf32> -> vector<64x128xf32>
    %c0_4 = arith.constant 0 : index
    %c0_5 = arith.constant 0 : index
    %4 = vector.load %arg4[%c0_4, %c0_5] : memref<1x128xf32, #tpu.memory_space<vmem>>, vector<1x128xf32>
    %5 = vector.broadcast %4 : vector<1x128xf32> to vector<64x128xf32>
    %6 = arith.addf %3, %5 : vector<64x128xf32>
    %7 = vector.shape_cast %6 : vector<64x128xf32> to vector<8x8x128xf32>
    %c0_6 = arith.constant 0 : index
    %c0_7 = arith.constant 0 : index
    %8 = vector.load %arg3[%c0_6, %c0_7] : memref<128x128xf32, #tpu.memory_space<vmem>>, vector<128x128xf32>
    %c0_8 = arith.constant 0 : index
    %c0_9 = arith.constant 0 : index
    %9 = vector.load %arg1[%c0_8, %c0_9] : memref<8x128xf32, #tpu.memory_space<vmem>>, vector<8x128xf32>
    %10 = vector.extract_strided_slice %7 {offsets = [0, 0, 0], sizes = [1, 8, 128], strides = [1, 1, 1]} : vector<8x8x128xf32> to vector<1x8x128xf32>
    %11 = vector.shape_cast %10 : vector<1x8x128xf32> to vector<8x128xf32>
    %cst_10 = arith.constant dense<0.000000e+00> : vector<8x128xf32>
    %12 = tpu.matmul %9, %8, %cst_10 {dimension_numbers = #tpu.dot_dimension_numbers<[1], [0], [0], [1], [0, 0, 1, 1], [], []>} : vector<8x128xf32>, vector<128x128xf32>, vector<8x128xf32> -> vector<8x128xf32>
    %13 = arith.addf %11, %12 : vector<8x128xf32>
    %14 = math.tanh %13 : vector<8x128xf32>
    %15 = vector.extract_strided_slice %7 {offsets = [1, 0, 0], sizes = [1, 8, 128], strides = [1, 1, 1]} : vector<8x8x128xf32> to vector<1x8x128xf32>
    %16 = vector.shape_cast %15 : vector<1x8x128xf32> to vector<8x128xf32>
    %cst_11 = arith.constant dense<0.000000e+00> : vector<8x128xf32>
    %17 = tpu.matmul %14, %8, %cst_11 {dimension_numbers = #tpu.dot_dimension_numbers<[1], [0], [0], [1], [0, 0, 1, 1], [], []>} : vector<8x128xf32>, vector<128x128xf32>, vector<8x128xf32> -> vector<8x128xf32>
    %18 = arith.addf %16, %17 : vector<8x128xf32>
    %19 = math.tanh %18 : vector<8x128xf32>
    %20 = vector.extract_strided_slice %7 {offsets = [2, 0, 0], sizes = [1, 8, 128], strides = [1, 1, 1]} : vector<8x8x128xf32> to vector<1x8x128xf32>
    %21 = vector.shape_cast %20 : vector<1x8x128xf32> to vector<8x128xf32>
    %cst_12 = arith.constant dense<0.000000e+00> : vector<8x128xf32>
    %22 = tpu.matmul %19, %8, %cst_12 {dimension_numbers = #tpu.dot_dimension_numbers<[1], [0], [0], [1], [0, 0, 1, 1], [], []>} : vector<8x128xf32>, vector<128x128xf32>, vector<8x128xf32> -> vector<8x128xf32>
    %23 = arith.addf %21, %22 : vector<8x128xf32>
    %24 = math.tanh %23 : vector<8x128xf32>
    %25 = vector.extract_strided_slice %7 {offsets = [3, 0, 0], sizes = [1, 8, 128], strides = [1, 1, 1]} : vector<8x8x128xf32> to vector<1x8x128xf32>
    %26 = vector.shape_cast %25 : vector<1x8x128xf32> to vector<8x128xf32>
    %cst_13 = arith.constant dense<0.000000e+00> : vector<8x128xf32>
    %27 = tpu.matmul %24, %8, %cst_13 {dimension_numbers = #tpu.dot_dimension_numbers<[1], [0], [0], [1], [0, 0, 1, 1], [], []>} : vector<8x128xf32>, vector<128x128xf32>, vector<8x128xf32> -> vector<8x128xf32>
    %28 = arith.addf %26, %27 : vector<8x128xf32>
    %29 = math.tanh %28 : vector<8x128xf32>
    %30 = vector.extract_strided_slice %7 {offsets = [4, 0, 0], sizes = [1, 8, 128], strides = [1, 1, 1]} : vector<8x8x128xf32> to vector<1x8x128xf32>
    %31 = vector.shape_cast %30 : vector<1x8x128xf32> to vector<8x128xf32>
    %cst_14 = arith.constant dense<0.000000e+00> : vector<8x128xf32>
    %32 = tpu.matmul %29, %8, %cst_14 {dimension_numbers = #tpu.dot_dimension_numbers<[1], [0], [0], [1], [0, 0, 1, 1], [], []>} : vector<8x128xf32>, vector<128x128xf32>, vector<8x128xf32> -> vector<8x128xf32>
    %33 = arith.addf %31, %32 : vector<8x128xf32>
    %34 = math.tanh %33 : vector<8x128xf32>
    %35 = vector.extract_strided_slice %7 {offsets = [5, 0, 0], sizes = [1, 8, 128], strides = [1, 1, 1]} : vector<8x8x128xf32> to vector<1x8x128xf32>
    %36 = vector.shape_cast %35 : vector<1x8x128xf32> to vector<8x128xf32>
    %cst_15 = arith.constant dense<0.000000e+00> : vector<8x128xf32>
    %37 = tpu.matmul %34, %8, %cst_15 {dimension_numbers = #tpu.dot_dimension_numbers<[1], [0], [0], [1], [0, 0, 1, 1], [], []>} : vector<8x128xf32>, vector<128x128xf32>, vector<8x128xf32> -> vector<8x128xf32>
    %38 = arith.addf %36, %37 : vector<8x128xf32>
    %39 = math.tanh %38 : vector<8x128xf32>
    %40 = vector.extract_strided_slice %7 {offsets = [6, 0, 0], sizes = [1, 8, 128], strides = [1, 1, 1]} : vector<8x8x128xf32> to vector<1x8x128xf32>
    %41 = vector.shape_cast %40 : vector<1x8x128xf32> to vector<8x128xf32>
    %cst_16 = arith.constant dense<0.000000e+00> : vector<8x128xf32>
    %42 = tpu.matmul %39, %8, %cst_16 {dimension_numbers = #tpu.dot_dimension_numbers<[1], [0], [0], [1], [0, 0, 1, 1], [], []>} : vector<8x128xf32>, vector<128x128xf32>, vector<8x128xf32> -> vector<8x128xf32>
    %43 = arith.addf %41, %42 : vector<8x128xf32>
    %44 = math.tanh %43 : vector<8x128xf32>
    %45 = vector.extract_strided_slice %7 {offsets = [7, 0, 0], sizes = [1, 8, 128], strides = [1, 1, 1]} : vector<8x8x128xf32> to vector<1x8x128xf32>
    %46 = vector.shape_cast %45 : vector<1x8x128xf32> to vector<8x128xf32>
    %cst_17 = arith.constant dense<0.000000e+00> : vector<8x128xf32>
    %47 = tpu.matmul %44, %8, %cst_17 {dimension_numbers = #tpu.dot_dimension_numbers<[1], [0], [0], [1], [0, 0, 1, 1], [], []>} : vector<8x128xf32>, vector<128x128xf32>, vector<8x128xf32> -> vector<8x128xf32>
    %48 = arith.addf %46, %47 : vector<8x128xf32>
    %49 = math.tanh %48 : vector<8x128xf32>
    %c0_18 = arith.constant 0 : index
    %c0_19 = arith.constant 0 : index
    %50 = vector.load %arg8[%c0_18, %c0_19] : memref<8x128xf32, #tpu.memory_space<vmem>>, vector<8x128xf32>
    tpu.vector_store %arg8[%c0_18, %c0_19], %49 {strides = array<i32>} : memref<8x128xf32, #tpu.memory_space<vmem>>, vector<8x128xf32>,
    %c0_20 = arith.constant 0 : index
    %c0_21 = arith.constant 0 : index
    %51 = vector.load %arg5[%c0_20, %c0_21] : memref<128x128xf32, #tpu.memory_space<vmem>>, vector<128x128xf32>
    %cst_22 = arith.constant dense<0.000000e+00> : vector<8x128xf32>
    %52 = tpu.matmul %49, %51, %cst_22 {dimension_numbers = #tpu.dot_dimension_numbers<[1], [0], [0], [1], [0, 0, 1, 1], [], []>} : vector<8x128xf32>, vector<128x128xf32>, vector<8x128xf32> -> vector<8x128xf32>
    %c0_23 = arith.constant 0 : index
    %c0_24 = arith.constant 0 : index
    %53 = vector.load %arg6[%c0_23, %c0_24] : memref<1x128xf32, #tpu.memory_space<vmem>>, vector<1x128xf32>
    %54 = vector.broadcast %53 : vector<1x128xf32> to vector<8x128xf32>
    %55 = arith.addf %52, %54 : vector<8x128xf32>
    %cst_25 = arith.constant dense<0xFF800000> : vector<8xf32>
    %56 = vector.multi_reduction <maximumf>, %55, %cst_25 [1] : vector<8x128xf32> to vector<8xf32>
    %57 = vector.shape_cast %56 : vector<8xf32> to vector<8x1xf32>
    %58 = vector.broadcast %57 : vector<8x1xf32> to vector<8x128xf32>
    %59 = arith.subf %55, %58 : vector<8x128xf32>
    %60 = math.exp %59 : vector<8x128xf32>
    %cst_26 = arith.constant dense<0.000000e+00> : vector<8xf32>
    %61 = vector.multi_reduction <add>, %60, %cst_26 [1] : vector<8x128xf32> to vector<8xf32>
    %62 = vector.shape_cast %61 : vector<8xf32> to vector<8x1xf32>
    %63 = math.log %62 : vector<8x1xf32>
    %64 = vector.broadcast %63 : vector<8x1xf32> to vector<8x128xf32>
    %65 = arith.subf %59, %64 : vector<8x128xf32>
    %c0_27 = arith.constant 0 : index
    %c0_28 = arith.constant 0 : index
    %66 = vector.load %arg7[%c0_27, %c0_28] : memref<8x128xf32, #tpu.memory_space<vmem>>, vector<8x128xf32>
    tpu.vector_store %arg7[%c0_27, %c0_28], %65 {strides = array<i32>} : memref<8x128xf32, #tpu.memory_space<vmem>>, vector<8x128xf32>,
    return
  }
}

</mosaic_0001>

<llo_original>
// kernel: nn_rnn_forward.1
$region0: #{nn_rnn_forward.1}
  #allocation0 [shape = 'u32[]', space=smem, size = 0x4, offset = 0x4, fixed_abs, tag = 'smem constant byte address 0x4 - core index']
  #allocation1 [shape = 'u32[144,128]{1,0:T(1,128)}', space=vmem, size = 0x12000, scoped, tag = 'internal scratch']
  %s0 = inlined_call_operand.vmem [shape: f32[8,8,128], index: 0, kind: input, shape index: {}]
  %s1 = inlined_call_operand.vmem [shape: f32[8,128], index: 1, kind: input, shape index: {}]
  %s2 = inlined_call_operand.vmem [shape: f32[128,128], index: 2, kind: input, shape index: {}]
  %s3 = inlined_call_operand.vmem [shape: f32[128,128], index: 3, kind: input, shape index: {}]
  %s4 = inlined_call_operand.vmem [shape: f32[1,128], index: 4, kind: input, shape index: {}]
  %s5 = inlined_call_operand.vmem [shape: f32[128,128], index: 5, kind: input, shape index: {}]
  %s6 = inlined_call_operand.vmem [shape: f32[1,128], index: 6, kind: input, shape index: {}]
  %s7 = inlined_call_operand.vmem [shape: f32[8,128], index: 7, kind: output, shape index: {0}]
  %s8 = inlined_call_operand.vmem [shape: f32[8,128], index: 8, kind: output, shape index: {1}]
  %9 = xla_tuple %s7, %s8
  %s10 = sld [smem:[#allocation0]]
  $region46: #{nn_rnn_forward.1} parent=0
    _
  %s12 = ssub.s32 1, %s10
  %s13 = scalar_select 0, %s12, %s10
  // Predicated region
  $region2: #{nn_rnn_forward.1} parent=0 // pred_check
    _
  $region3: #{nn_rnn_forward.1} parent=0 // pred_check_branch
    %15 = sbr.rel (0) target = $region5
  $region4: #{nn_rnn_forward.1} parent=0 // pred_region
    _
  $region5: #{nn_rnn_forward.1} parent=0 // pred_fallthru
    _
  // Predicated region
  $region6: #{nn_rnn_forward.1} parent=0 // pred_check
    _
  $region7: #{nn_rnn_forward.1} parent=0 // pred_check_branch
    %17 = sbr.rel (0) target = $region9
  $region8: #{nn_rnn_forward.1} parent=0 // pred_region
    _
  $region9: #{nn_rnn_forward.1} parent=0 // pred_fallthru
    _
  // Predicated region
  $region10: #{nn_rnn_forward.1} parent=0 // pred_check
    _
  $region11: #{nn_rnn_forward.1} parent=0 // pred_check_branch
    %19 = sbr.rel (0) target = $region13
  $region12: #{nn_rnn_forward.1} parent=0 // pred_region
    _
  $region13: #{nn_rnn_forward.1} parent=0 // pred_fallthru
    _
  // Predicated region
  $region14: #{nn_rnn_forward.1} parent=0 // pred_check
    _
  $region15: #{nn_rnn_forward.1} parent=0 // pred_check_branch
    %21 = sbr.rel (0) target = $region17
  $region16: #{nn_rnn_forward.1} parent=0 // pred_region
    _
  $region17: #{nn_rnn_forward.1} parent=0 // pred_fallthru
    _
  // Predicated region
  $region18: #{nn_rnn_forward.1} parent=0 // pred_check
    _
  $region19: #{nn_rnn_forward.1} parent=0 // pred_check_branch
    %23 = sbr.rel (0) target = $region21
  $region20: #{nn_rnn_forward.1} parent=0 // pred_region
    _
  $region21: #{nn_rnn_forward.1} parent=0 // pred_fallthru
    _
  // Predicated region
  $region22: #{nn_rnn_forward.1} parent=0 // pred_check
    _
  $region23: #{nn_rnn_forward.1} parent=0 // pred_check_branch
    %25 = sbr.rel (0) target = $region25
  $region24: #{nn_rnn_forward.1} parent=0 // pred_region
    _
  $region25: #{nn_rnn_forward.1} parent=0 // pred_fallthru
    _
  // Predicated region
  $region26: #{nn_rnn_forward.1} parent=0 // pred_check
    _
  $region27: #{nn_rnn_forward.1} parent=0 // pred_check_branch
    %27 = sbr.rel (0) target = $region29
  $region28: #{nn_rnn_forward.1} parent=0 // pred_region
    _
  $region29: #{nn_rnn_forward.1} parent=0 // pred_fallthru
    _
  %v28 = vld [vmem:[%s0] sm:$0xff]
  %v29 = vld [vmem:[%s0 + $0x8] sm:$0xff]
  %v30 = vld [vmem:[%s0 + $0x10] sm:$0xff]
  %v31 = vld [vmem:[%s0 + $0x18] sm:$0xff]
  %v32 = vld [vmem:[%s0 + $0x20] sm:$0xff]
  %v33 = vld [vmem:[%s0 + $0x28] sm:$0xff]
  %v34 = vld [vmem:[%s0 + $0x30] sm:$0xff]
  %v35 = vld [vmem:[%s0 + $0x38] sm:$0xff]
  %v36 = vld [vmem:[%s2] sm:$0xff]
  %v37 = vld [vmem:[%s2 + $0x8] sm:$0xff]
  %v38 = vld [vmem:[%s2 + $0x10] sm:$0xff]
  %v39 = vld [vmem:[%s2 + $0x18] sm:$0xff]
  %v40 = vld [vmem:[%s2 + $0x20] sm:$0xff]
  %v41 = vld [vmem:[%s2 + $0x28] sm:$0xff]
  %v42 = vld [vmem:[%s2 + $0x30] sm:$0xff]
  %v43 = vld [vmem:[%s2 + $0x38] sm:$0xff]
  %v44 = vld [vmem:[%s2 + $0x40] sm:$0xff]
  %v45 = vld [vmem:[%s2 + $0x48] sm:$0xff]
  %v46 = vld [vmem:[%s2 + $0x50] sm:$0xff]
  %v47 = vld [vmem:[%s2 + $0x58] sm:$0xff]
  %v48 = vld [vmem:[%s2 + $0x60] sm:$0xff]
  %v49 = vld [vmem:[%s2 + $0x68] sm:$0xff]
  %v50 = vld [vmem:[%s2 + $0x70] sm:$0xff]
  %v51 = vld [vmem:[%s2 + $0x78] sm:$0xff]
  %v52 = vld [vmem:[%s4] sm:$0x1]
  %v54 = vlaneseq
  %v55 = vshrl.u32 %v54, 7
  %v56 = vsub.s32 0, %v55
  %v57 = vrot.slane %v52, %v56
  %59 = vmatprep.subr.mxu0 0.0
  %60 = vmatpush1.msra.mxu0 %v36
  %61 = vmatprep.subr.mxu0 0.0
  %62 = vmatpush1.msra.mxu0 %v37
  %63 = vmatprep.subr.mxu0 0.0
  %64 = vmatpush1.msra.mxu0 %v38
  %65 = vmatprep.subr.mxu0 0.0
  %66 = vmatpush1.msra.mxu0 %v39
  %67 = vmatprep.subr.mxu0 0.0
  %68 = vmatpush1.msra.mxu0 %v40
  %69 = vmatprep.subr.mxu0 0.0
  %70 = vmatpush1.msra.mxu0 %v41
  %71 = vmatprep.subr.mxu0 0.0
  %72 = vmatpush1.msra.mxu0 %v42
  %73 = vmatprep.subr.mxu0 0.0
  %74 = vmatpush1.msra.mxu0 %v43
  %75 = vmatprep.subr.mxu0 0.0
  %76 = vmatpush1.msra.mxu0 %v44
  %77 = vmatprep.subr.mxu0 0.0
  %78 = vmatpush1.msra.mxu0 %v45
  %79 = vmatprep.subr.mxu0 0.0
  %80 = vmatpush1.msra.mxu0 %v46
  %81 = vmatprep.subr.mxu0 0.0
  %82 = vmatpush1.msra.mxu0 %v47
  %83 = vmatprep.subr.mxu0 0.0
  %84 = vmatpush1.msra.mxu0 %v48
  %85 = vmatprep.subr.mxu0 0.0
  %86 = vmatpush1.msra.mxu0 %v49
  %87 = vmatprep.subr.mxu0 0.0
  %88 = vmatpush1.msra.mxu0 %v50
  %89 = vmatprep.subr.mxu0 0.0
  %90 = vmatpush1.msra.mxu0 %v51
  %91 = vmatprep.subr.mxu0 0.0
  %92 = vmatpush1.msra.mxu0 0.0
  %93 = vmatprep.subr.mxu0 0.0
  %94 = vmatpush1.msra.mxu0 0.0
  %95 = vmatprep.subr.mxu0 0.0
  %96 = vmatpush1.msra.mxu0 0.0
  %97 = vmatprep.subr.mxu0 0.0
  %98 = vmatpush1.msra.mxu0 0.0
  %99 = vmatprep.subr.mxu0 0.0
  %100 = vmatpush1.msra.mxu0 0.0
  %101 = vmatprep.subr.mxu0 0.0
  %102 = vmatpush1.msra.mxu0 0.0
  %103 = vmatprep.subr.mxu0 0.0
  %104 = vmatpush1.msra.mxu0 0.0
  %105 = vmatprep.subr.mxu0 0.0
  %106 = vmatpush1.msra.mxu0 0.0
  %107 = vmatprep.subr.mxu0 0.0
  %108 = vmatpush1.msra.mxu0 0.0
  %109 = vmatprep.subr.mxu0 0.0
  %110 = vmatpush1.msra.mxu0 0.0
  %111 = vmatprep.subr.mxu0 0.0
  %112 = vmatpush1.msra.mxu0 0.0
  %113 = vmatprep.subr.mxu0 0.0
  %114 = vmatpush1.msra.mxu0 0.0
  %115 = vmatprep.subr.mxu0 0.0
  %116 = vmatpush1.msra.mxu0 0.0
  %117 = vmatprep.subr.mxu0 0.0
  %118 = vmatpush1.msra.mxu0 0.0
  %119 = vmatprep.subr.mxu0 0.0
  %120 = vmatpush1.msra.mxu0 0.0
  %121 = vmatprep.subr.mxu0 0.0
  %122 = vmatpush1.msra.mxu0 0.0
  %123 = vmatprep.mubr.f32.mxu0 0.0
  %124 = vmatmul.mubr.f32.gmra.mrb[0].mxu0 %v28
  %v125 = vpop.f32.mrb[0].mxu0
  %v126 = vadd.f32 %v57, %v125
  %v127 = vpop.f32.mrb[0].mxu0
  %128 = vmatprep.mubr.f32.mxu0 0.0
  %129 = vmatmul.mubr.f32.gmra.mrb[0].mxu0 %v29
  %v130 = vpop.f32.mrb[0].mxu0
  %v131 = vadd.f32 %v57, %v130
  %v132 = vpop.f32.mrb[0].mxu0
  %133 = vmatprep.mubr.f32.mxu0 0.0
  %134 = vmatmul.mubr.f32.gmra.mrb[0].mxu0 %v30
  %v135 = vpop.f32.mrb[0].mxu0
  %v136 = vadd.f32 %v57, %v135
  %v137 = vpop.f32.mrb[0].mxu0
  %138 = vmatprep.mubr.f32.mxu0 0.0
  %139 = vmatmul.mubr.f32.gmra.mrb[0].mxu0 %v31
  %v140 = vpop.f32.mrb[0].mxu0
  %v141 = vadd.f32 %v57, %v140
  %v142 = vpop.f32.mrb[0].mxu0
  %143 = vmatprep.mubr.f32.mxu0 0.0
  %144 = vmatmul.mubr.f32.gmra.mrb[0].mxu0 %v32
  %v145 = vpop.f32.mrb[0].mxu0
  %v146 = vadd.f32 %v57, %v145
  %v147 = vpop.f32.mrb[0].mxu0
  %148 = vmatprep.mubr.f32.mxu0 0.0
  %149 = vmatmul.mubr.f32.gmra.mrb[0].mxu0 %v33
  %v150 = vpop.f32.mrb[0].mxu0
  %v151 = vadd.f32 %v57, %v150
  %v152 = vpop.f32.mrb[0].mxu0
  %153 = vmatprep.mubr.f32.mxu0 0.0
  %154 = vmatmul.mubr.f32.gmra.mrb[0].mxu0 %v34
  %v155 = vpop.f32.mrb[0].mxu0
  %v156 = vadd.f32 %v57, %v155
  %v157 = vpop.f32.mrb[0].mxu0
  %158 = vmatprep.mubr.f32.mxu0 0.0
  %159 = vmatmul.mubr.f32.gmra.mrb[0].mxu0 %v35
  %v160 = vpop.f32.mrb[0].mxu0
  %v161 = vadd.f32 %v57, %v160
  %v162 = vpop.f32.mrb[0].mxu0
  %163 = vdwg.mxu0
  %v164 = vld [vmem:[%s3] sm:$0xff]
  %v165 = vld [vmem:[%s3 + $0x8] sm:$0xff]
  %v166 = vld [vmem:[%s3 + $0x10] sm:$0xff]
  %v167 = vld [vmem:[%s3 + $0x18] sm:$0xff]
  %v168 = vld [vmem:[%s3 + $0x20] sm:$0xff]
  %v169 = vld [vmem:[%s3 + $0x28] sm:$0xff]
  %v170 = vld [vmem:[%s3 + $0x30] sm:$0xff]
  %v171 = vld [vmem:[%s3 + $0x38] sm:$0xff]
  %v172 = vld [vmem:[%s3 + $0x40] sm:$0xff]
  %v173 = vld [vmem:[%s3 + $0x48] sm:$0xff]
  %v174 = vld [vmem:[%s3 + $0x50] sm:$0xff]
  %v175 = vld [vmem:[%s3 + $0x58] sm:$0xff]
  %v176 = vld [vmem:[%s3 + $0x60] sm:$0xff]
  %v177 = vld [vmem:[%s3 + $0x68] sm:$0xff]
  %v178 = vld [vmem:[%s3 + $0x70] sm:$0xff]
  %v179 = vld [vmem:[%s3 + $0x78] sm:$0xff]
  %v180 = vld [vmem:[%s1] sm:$0xff]
  %181 = vmatprep.subr.mxu0 0.0
  %182 = vmatpush1.msra.mxu0 %v164
  %183 = vmatprep.subr.mxu0 0.0
  %184 = vmatpush1.msra.mxu0 %v165
  %185 = vmatprep.subr.mxu0 0.0
  %186 = vmatpush1.msra.mxu0 %v166
  %187 = vmatprep.subr.mxu0 0.0
  %188 = vmatpush1.msra.mxu0 %v167
  %189 = vmatprep.subr.mxu0 0.0
  %190 = vmatpush1.msra.mxu0 %v168
  %191 = vmatprep.subr.mxu0 0.0
  %192 = vmatpush1.msra.mxu0 %v169
  %193 = vmatprep.subr.mxu0 0.0
  %194 = vmatpush1.msra.mxu0 %v170
  %195 = vmatprep.subr.mxu0 0.0
  %196 = vmatpush1.msra.mxu0 %v171
  %197 = vmatprep.subr.mxu0 0.0
  %198 = vmatpush1.msra.mxu0 %v172
  %199 = vmatprep.subr.mxu0 0.0
  %200 = vmatpush1.msra.mxu0 %v173
  %201 = vmatprep.subr.mxu0 0.0
  %202 = vmatpush1.msra.mxu0 %v174
  %203 = vmatprep.subr.mxu0 0.0
  %204 = vmatpush1.msra.mxu0 %v175
  %205 = vmatprep.subr.mxu0 0.0
  %206 = vmatpush1.msra.mxu0 %v176
  %207 = vmatprep.subr.mxu0 0.0
  %208 = vmatpush1.msra.mxu0 %v177
  %209 = vmatprep.subr.mxu0 0.0
  %210 = vmatpush1.msra.mxu0 %v178
  %211 = vmatprep.subr.mxu0 0.0
  %212 = vmatpush1.msra.mxu0 %v179
  %213 = vmatprep.subr.mxu0 0.0
  %214 = vmatpush1.msra.mxu0 0.0
  %215 = vmatprep.subr.mxu0 0.0
  %216 = vmatpush1.msra.mxu0 0.0
  %217 = vmatprep.subr.mxu0 0.0
  %218 = vmatpush1.msra.mxu0 0.0
  %219 = vmatprep.subr.mxu0 0.0
  %220 = vmatpush1.msra.mxu0 0.0
  %221 = vmatprep.subr.mxu0 0.0
  %222 = vmatpush1.msra.mxu0 0.0
  %223 = vmatprep.subr.mxu0 0.0
  %224 = vmatpush1.msra.mxu0 0.0
  %225 = vmatprep.subr.mxu0 0.0
  %226 = vmatpush1.msra.mxu0 0.0
  %227 = vmatprep.subr.mxu0 0.0
  %228 = vmatpush1.msra.mxu0 0.0
  %229 = vmatprep.subr.mxu0 0.0
  %230 = vmatpush1.msra.mxu0 0.0
  %231 = vmatprep.subr.mxu0 0.0
  %232 = vmatpush1.msra.mxu0 0.0
  %233 = vmatprep.subr.mxu0 0.0
  %234 = vmatpush1.msra.mxu0 0.0
  %235 = vmatprep.subr.mxu0 0.0
  %236 = vmatpush1.msra.mxu0 0.0
  %237 = vmatprep.subr.mxu0 0.0
  %238 = vmatpush1.msra.mxu0 0.0
  %239 = vmatprep.subr.mxu0 0.0
  %240 = vmatpush1.msra.mxu0 0.0
  %241 = vmatprep.subr.mxu0 0.0
  %242 = vmatpush1.msra.mxu0 0.0
  %243 = vmatprep.subr.mxu0 0.0
  %244 = vmatpush1.msra.mxu0 0.0
  %245 = vmatprep.mubr.f32.mxu0 0.0
  %246 = vmatmul.mubr.f32.gmra.mrb[0].mxu0 %v180
  %v247 = vpop.f32.mrb[0].mxu0
  %v248 = vadd.f32 0.0, %v247
  %v249 = vpop.f32.mrb[0].mxu0
  %250 = vdwg.mxu0
  %v251 = vadd.f32 %v126, %v248
  %v252 = vtanh.pop %v251
  %253 = vmatprep.subr.mxu0 0.0
  %254 = vmatpush1.msra.mxu0 %v164
  %255 = vmatprep.subr.mxu0 0.0
  %256 = vmatpush1.msra.mxu0 %v165
  %257 = vmatprep.subr.mxu0 0.0
  %258 = vmatpush1.msra.mxu0 %v166
  %259 = vmatprep.subr.mxu0 0.0
  %260 = vmatpush1.msra.mxu0 %v167
  %261 = vmatprep.subr.mxu0 0.0
  %262 = vmatpush1.msra.mxu0 %v168
  %263 = vmatprep.subr.mxu0 0.0
  %264 = vmatpush1.msra.mxu0 %v169
  %265 = vmatprep.subr.mxu0 0.0
  %266 = vmatpush1.msra.mxu0 %v170
  %267 = vmatprep.subr.mxu0 0.0
  %268 = vmatpush1.msra.mxu0 %v171
  %269 = vmatprep.subr.mxu0 0.0
  %270 = vmatpush1.msra.mxu0 %v172
  %271 = vmatprep.subr.mxu0 0.0
  %272 = vmatpush1.msra.mxu0 %v173
  %273 = vmatprep.subr.mxu0 0.0
  %274 = vmatpush1.msra.mxu0 %v174
  %275 = vmatprep.subr.mxu0 0.0
  %276 = vmatpush1.msra.mxu0 %v175
  %277 = vmatprep.subr.mxu0 0.0
  %278 = vmatpush1.msra.mxu0 %v176
  %279 = vmatprep.subr.mxu0 0.0
  %280 = vmatpush1.msra.mxu0 %v177
  %281 = vmatprep.subr.mxu0 0.0
  %282 = vmatpush1.msra.mxu0 %v178
  %283 = vmatprep.subr.mxu0 0.0
  %284 = vmatpush1.msra.mxu0 %v179
  %285 = vmatprep.subr.mxu0 0.0
  %286 = vmatpush1.msra.mxu0 0.0
  %287 = vmatprep.subr.mxu0 0.0
  %288 = vmatpush1.msra.mxu0 0.0
  %289 = vmatprep.subr.mxu0 0.0
  %290 = vmatpush1.msra.mxu0 0.0
  %291 = vmatprep.subr.mxu0 0.0
  %292 = vmatpush1.msra.mxu0 0.0
  %293 = vmatprep.subr.mxu0 0.0
  %294 = vmatpush1.msra.mxu0 0.0
  %295 = vmatprep.subr.mxu0 0.0
  %296 = vmatpush1.msra.mxu0 0.0
  %297 = vmatprep.subr.mxu0 0.0
  %298 = vmatpush1.msra.mxu0 0.0
  %299 = vmatprep.subr.mxu0 0.0
  %300 = vmatpush1.msra.mxu0 0.0
  %301 = vmatprep.subr.mxu0 0.0
  %302 = vmatpush1.msra.mxu0 0.0
  %303 = vmatprep.subr.mxu0 0.0
  %304 = vmatpush1.msra.mxu0 0.0
  %305 = vmatprep.subr.mxu0 0.0
  %306 = vmatpush1.msra.mxu0 0.0
  %307 = vmatprep.subr.mxu0 0.0
  %308 = vmatpush1.msra.mxu0 0.0
  %309 = vmatprep.subr.mxu0 0.0
  %310 = vmatpush1.msra.mxu0 0.0
  %311 = vmatprep.subr.mxu0 0.0
  %312 = vmatpush1.msra.mxu0 0.0
  %313 = vmatprep.subr.mxu0 0.0
  %314 = vmatpush1.msra.mxu0 0.0
  %315 = vmatprep.subr.mxu0 0.0
  %316 = vmatpush1.msra.mxu0 0.0
  %317 = vmatprep.mubr.f32.mxu0 0.0
  %318 = vmatmul.mubr.f32.gmra.mrb[0].mxu0 %v252
  %v319 = vpop.f32.mrb[0].mxu0
  %v320 = vadd.f32 0.0, %v319
  %v321 = vpop.f32.mrb[0].mxu0
  %322 = vdwg.mxu0
  %v323 = vadd.f32 %v131, %v320
  %v324 = vtanh.pop %v323
  %325 = vmatprep.subr.mxu0 0.0
  %326 = vmatpush1.msra.mxu0 %v164
  %327 = vmatprep.subr.mxu0 0.0
  %328 = vmatpush1.msra.mxu0 %v165
  %329 = vmatprep.subr.mxu0 0.0
  %330 = vmatpush1.msra.mxu0 %v166
  %331 = vmatprep.subr.mxu0 0.0
  %332 = vmatpush1.msra.mxu0 %v167
  %333 = vmatprep.subr.mxu0 0.0
  %334 = vmatpush1.msra.mxu0 %v168
  %335 = vmatprep.subr.mxu0 0.0
  %336 = vmatpush1.msra.mxu0 %v169
  %337 = vmatprep.subr.mxu0 0.0
  %338 = vmatpush1.msra.mxu0 %v170
  %339 = vmatprep.subr.mxu0 0.0
  %340 = vmatpush1.msra.mxu0 %v171
  %341 = vmatprep.subr.mxu0 0.0
  %342 = vmatpush1.msra.mxu0 %v172
  %343 = vmatprep.subr.mxu0 0.0
  %344 = vmatpush1.msra.mxu0 %v173
  %345 = vmatprep.subr.mxu0 0.0
  %346 = vmatpush1.msra.mxu0 %v174
  %347 = vmatprep.subr.mxu0 0.0
  %348 = vmatpush1.msra.mxu0 %v175
  %349 = vmatprep.subr.mxu0 0.0
  %350 = vmatpush1.msra.mxu0 %v176
  %351 = vmatprep.subr.mxu0 0.0
  %352 = vmatpush1.msra.mxu0 %v177
  %353 = vmatprep.subr.mxu0 0.0
  %354 = vmatpush1.msra.mxu0 %v178
  %355 = vmatprep.subr.mxu0 0.0
  %356 = vmatpush1.msra.mxu0 %v179
  %357 = vmatprep.subr.mxu0 0.0
  %358 = vmatpush1.msra.mxu0 0.0
  %359 = vmatprep.subr.mxu0 0.0
  %360 = vmatpush1.msra.mxu0 0.0
  %361 = vmatprep.subr.mxu0 0.0
  %362 = vmatpush1.msra.mxu0 0.0
  %363 = vmatprep.subr.mxu0 0.0
  %364 = vmatpush1.msra.mxu0 0.0
  %365 = vmatprep.subr.mxu0 0.0
  %366 = vmatpush1.msra.mxu0 0.0
  %367 = vmatprep.subr.mxu0 0.0
  %368 = vmatpush1.msra.mxu0 0.0
  %369 = vmatprep.subr.mxu0 0.0
  %370 = vmatpush1.msra.mxu0 0.0
  %371 = vmatprep.subr.mxu0 0.0
  %372 = vmatpush1.msra.mxu0 0.0
  %373 = vmatprep.subr.mxu0 0.0
  %374 = vmatpush1.msra.mxu0 0.0
  %375 = vmatprep.subr.mxu0 0.0
  %376 = vmatpush1.msra.mxu0 0.0
  %377 = vmatprep.subr.mxu0 0.0
  %378 = vmatpush1.msra.mxu0 0.0
  %379 = vmatprep.subr.mxu0 0.0
  %380 = vmatpush1.msra.mxu0 0.0
  %381 = vmatprep.subr.mxu0 0.0
  %382 = vmatpush1.msra.mxu0 0.0
  %383 = vmatprep.subr.mxu0 0.0
  %384 = vmatpush1.msra.mxu0 0.0
  %385 = vmatprep.subr.mxu0 0.0
  %386 = vmatpush1.msra.mxu0 0.0
  %387 = vmatprep.subr.mxu0 0.0
  %388 = vmatpush1.msra.mxu0 0.0
  %389 = vmatprep.mubr.f32.mxu0 0.0
  %390 = vmatmul.mubr.f32.gmra.mrb[0].mxu0 %v324
  %v391 = vpop.f32.mrb[0].mxu0
  %v392 = vadd.f32 0.0, %v391
  %v393 = vpop.f32.mrb[0].mxu0
  %394 = vdwg.mxu0
  %v395 = vadd.f32 %v136, %v392
  %v396 = vtanh.pop %v395
  %397 = vmatprep.subr.mxu0 0.0
  %398 = vmatpush1.msra.mxu0 %v164
  %399 = vmatprep.subr.mxu0 0.0
  %400 = vmatpush1.msra.mxu0 %v165
  %401 = vmatprep.subr.mxu0 0.0
  %402 = vmatpush1.msra.mxu0 %v166
  %403 = vmatprep.subr.mxu0 0.0
  %404 = vmatpush1.msra.mxu0 %v167
  %405 = vmatprep.subr.mxu0 0.0
  %406 = vmatpush1.msra.mxu0 %v168
  %407 = vmatprep.subr.mxu0 0.0
  %408 = vmatpush1.msra.mxu0 %v169
  %409 = vmatprep.subr.mxu0 0.0
  %410 = vmatpush1.msra.mxu0 %v170
  %411 = vmatprep.subr.mxu0 0.0
  %412 = vmatpush1.msra.mxu0 %v171
  %413 = vmatprep.subr.mxu0 0.0
  %414 = vmatpush1.msra.mxu0 %v172
  %415 = vmatprep.subr.mxu0 0.0
  %416 = vmatpush1.msra.mxu0 %v173
  %417 = vmatprep.subr.mxu0 0.0
  %418 = vmatpush1.msra.mxu0 %v174
  %419 = vmatprep.subr.mxu0 0.0
  %420 = vmatpush1.msra.mxu0 %v175
  %421 = vmatprep.subr.mxu0 0.0
  %422 = vmatpush1.msra.mxu0 %v176
  %423 = vmatprep.subr.mxu0 0.0
  %424 = vmatpush1.msra.mxu0 %v177
  %425 = vmatprep.subr.mxu0 0.0
  %426 = vmatpush1.msra.mxu0 %v178
  %427 = vmatprep.subr.mxu0 0.0
  %428 = vmatpush1.msra.mxu0 %v179
  %429 = vmatprep.subr.mxu0 0.0
  %430 = vmatpush1.msra.mxu0 0.0
  %431 = vmatprep.subr.mxu0 0.0
  %432 = vmatpush1.msra.mxu0 0.0
  %433 = vmatprep.subr.mxu0 0.0
  %434 = vmatpush1.msra.mxu0 0.0
  %435 = vmatprep.subr.mxu0 0.0
  %436 = vmatpush1.msra.mxu0 0.0
  %437 = vmatprep.subr.mxu0 0.0
  %438 = vmatpush1.msra.mxu0 0.0
  %439 = vmatprep.subr.mxu0 0.0
  %440 = vmatpush1.msra.mxu0 0.0
  %441 = vmatprep.subr.mxu0 0.0
  %442 = vmatpush1.msra.mxu0 0.0
  %443 = vmatprep.subr.mxu0 0.0
  %444 = vmatpush1.msra.mxu0 0.0
  %445 = vmatprep.subr.mxu0 0.0
  %446 = vmatpush1.msra.mxu0 0.0
  %447 = vmatprep.subr.mxu0 0.0
  %448 = vmatpush1.msra.mxu0 0.0
  %449 = vmatprep.subr.mxu0 0.0
  %450 = vmatpush1.msra.mxu0 0.0
  %451 = vmatprep.subr.mxu0 0.0
  %452 = vmatpush1.msra.mxu0 0.0
  %453 = vmatprep.subr.mxu0 0.0
  %454 = vmatpush1.msra.mxu0 0.0
  %455 = vmatprep.subr.mxu0 0.0
  %456 = vmatpush1.msra.mxu0 0.0
  %457 = vmatprep.subr.mxu0 0.0
  %458 = vmatpush1.msra.mxu0 0.0
  %459 = vmatprep.subr.mxu0 0.0
  %460 = vmatpush1.msra.mxu0 0.0
  %461 = vmatprep.mubr.f32.mxu0 0.0
  %462 = vmatmul.mubr.f32.gmra.mrb[0].mxu0 %v396
  %v463 = vpop.f32.mrb[0].mxu0
  %v464 = vadd.f32 0.0, %v463
  %v465 = vpop.f32.mrb[0].mxu0
  %466 = vdwg.mxu0
  %v467 = vadd.f32 %v141, %v464
  %v468 = vtanh.pop %v467
  %469 = vmatprep.subr.mxu0 0.0
  %470 = vmatpush1.msra.mxu0 %v164
  %471 = vmatprep.subr.mxu0 0.0
  %472 = vmatpush1.msra.mxu0 %v165
  %473 = vmatprep.subr.mxu0 0.0
  %474 = vmatpush1.msra.mxu0 %v166
  %475 = vmatprep.subr.mxu0 0.0
  %476 = vmatpush1.msra.mxu0 %v167
  %477 = vmatprep.subr.mxu0 0.0
  %478 = vmatpush1.msra.mxu0 %v168
  %479 = vmatprep.subr.mxu0 0.0
  %480 = vmatpush1.msra.mxu0 %v169
  %481 = vmatprep.subr.mxu0 0.0
  %482 = vmatpush1.msra.mxu0 %v170
  %483 = vmatprep.subr.mxu0 0.0
  %484 = vmatpush1.msra.mxu0 %v171
  %485 = vmatprep.subr.mxu0 0.0
  %486 = vmatpush1.msra.mxu0 %v172
  %487 = vmatprep.subr.mxu0 0.0
  %488 = vmatpush1.msra.mxu0 %v173
  %489 = vmatprep.subr.mxu0 0.0
  %490 = vmatpush1.msra.mxu0 %v174
  %491 = vmatprep.subr.mxu0 0.0
  %492 = vmatpush1.msra.mxu0 %v175
  %493 = vmatprep.subr.mxu0 0.0
  %494 = vmatpush1.msra.mxu0 %v176
  %495 = vmatprep.subr.mxu0 0.0
  %496 = vmatpush1.msra.mxu0 %v177
  %497 = vmatprep.subr.mxu0 0.0
  %498 = vmatpush1.msra.mxu0 %v178
  %499 = vmatprep.subr.mxu0 0.0
  %500 = vmatpush1.msra.mxu0 %v179
  %501 = vmatprep.subr.mxu0 0.0
  %502 = vmatpush1.msra.mxu0 0.0
  %503 = vmatprep.subr.mxu0 0.0
  %504 = vmatpush1.msra.mxu0 0.0
  %505 = vmatprep.subr.mxu0 0.0
  %506 = vmatpush1.msra.mxu0 0.0
  %507 = vmatprep.subr.mxu0 0.0
  %508 = vmatpush1.msra.mxu0 0.0
  %509 = vmatprep.subr.mxu0 0.0
  %510 = vmatpush1.msra.mxu0 0.0
  %511 = vmatprep.subr.mxu0 0.0
  %512 = vmatpush1.msra.mxu0 0.0
  %513 = vmatprep.subr.mxu0 0.0
  %514 = vmatpush1.msra.mxu0 0.0
  %515 = vmatprep.subr.mxu0 0.0
  %516 = vmatpush1.msra.mxu0 0.0
  %517 = vmatprep.subr.mxu0 0.0
  %518 = vmatpush1.msra.mxu0 0.0
  %519 = vmatprep.subr.mxu0 0.0
  %520 = vmatpush1.msra.mxu0 0.0
  %521 = vmatprep.subr.mxu0 0.0
  %522 = vmatpush1.msra.mxu0 0.0
  %523 = vmatprep.subr.mxu0 0.0
  %524 = vmatpush1.msra.mxu0 0.0
  %525 = vmatprep.subr.mxu0 0.0
  %526 = vmatpush1.msra.mxu0 0.0
  %527 = vmatprep.subr.mxu0 0.0
  %528 = vmatpush1.msra.mxu0 0.0
  %529 = vmatprep.subr.mxu0 0.0
  %530 = vmatpush1.msra.mxu0 0.0
  %531 = vmatprep.subr.mxu0 0.0
  %532 = vmatpush1.msra.mxu0 0.0
  %533 = vmatprep.mubr.f32.mxu0 0.0
  %534 = vmatmul.mubr.f32.gmra.mrb[0].mxu0 %v468
  %v535 = vpop.f32.mrb[0].mxu0
  %v536 = vadd.f32 0.0, %v535
  %v537 = vpop.f32.mrb[0].mxu0
  %538 = vdwg.mxu0
  %v539 = vadd.f32 %v146, %v536
  %v540 = vtanh.pop %v539
  %541 = vmatprep.subr.mxu0 0.0
  %542 = vmatpush1.msra.mxu0 %v164
  %543 = vmatprep.subr.mxu0 0.0
  %544 = vmatpush1.msra.mxu0 %v165
  %545 = vmatprep.subr.mxu0 0.0
  %546 = vmatpush1.msra.mxu0 %v166
  %547 = vmatprep.subr.mxu0 0.0
  %548 = vmatpush1.msra.mxu0 %v167
  %549 = vmatprep.subr.mxu0 0.0
  %550 = vmatpush1.msra.mxu0 %v168
  %551 = vmatprep.subr.mxu0 0.0
  %552 = vmatpush1.msra.mxu0 %v169
  %553 = vmatprep.subr.mxu0 0.0
  %554 = vmatpush1.msra.mxu0 %v170
  %555 = vmatprep.subr.mxu0 0.0
  %556 = vmatpush1.msra.mxu0 %v171
  %557 = vmatprep.subr.mxu0 0.0
  %558 = vmatpush1.msra.mxu0 %v172
  %559 = vmatprep.subr.mxu0 0.0
  %560 = vmatpush1.msra.mxu0 %v173
  %561 = vmatprep.subr.mxu0 0.0
  %562 = vmatpush1.msra.mxu0 %v174
  %563 = vmatprep.subr.mxu0 0.0
  %564 = vmatpush1.msra.mxu0 %v175
  %565 = vmatprep.subr.mxu0 0.0
  %566 = vmatpush1.msra.mxu0 %v176
  %567 = vmatprep.subr.mxu0 0.0
  %568 = vmatpush1.msra.mxu0 %v177
  %569 = vmatprep.subr.mxu0 0.0
  %570 = vmatpush1.msra.mxu0 %v178
  %571 = vmatprep.subr.mxu0 0.0
  %572 = vmatpush1.msra.mxu0 %v179
  %573 = vmatprep.subr.mxu0 0.0
  %574 = vmatpush1.msra.mxu0 0.0
  %575 = vmatprep.subr.mxu0 0.0
  %576 = vmatpush1.msra.mxu0 0.0
  %577 = vmatprep.subr.mxu0 0.0
  %578 = vmatpush1.msra.mxu0 0.0
  %579 = vmatprep.subr.mxu0 0.0
  %580 = vmatpush1.msra.mxu0 0.0
  %581 = vmatprep.subr.mxu0 0.0
  %582 = vmatpush1.msra.mxu0 0.0
  %583 = vmatprep.subr.mxu0 0.0
  %584 = vmatpush1.msra.mxu0 0.0
  %585 = vmatprep.subr.mxu0 0.0
  %586 = vmatpush1.msra.mxu0 0.0
  %587 = vmatprep.subr.mxu0 0.0
  %588 = vmatpush1.msra.mxu0 0.0
  %589 = vmatprep.subr.mxu0 0.0
  %590 = vmatpush1.msra.mxu0 0.0
  %591 = vmatprep.subr.mxu0 0.0
  %592 = vmatpush1.msra.mxu0 0.0
  %593 = vmatprep.subr.mxu0 0.0
  %594 = vmatpush1.msra.mxu0 0.0
  %595 = vmatprep.subr.mxu0 0.0
  %596 = vmatpush1.msra.mxu0 0.0
  %597 = vmatprep.subr.mxu0 0.0
  %598 = vmatpush1.msra.mxu0 0.0
  %599 = vmatprep.subr.mxu0 0.0
  %600 = vmatpush1.msra.mxu0 0.0
  %601 = vmatprep.subr.mxu0 0.0
  %602 = vmatpush1.msra.mxu0 0.0
  %603 = vmatprep.subr.mxu0 0.0
  %604 = vmatpush1.msra.mxu0 0.0
  %605 = vmatprep.mubr.f32.mxu0 0.0
  %606 = vmatmul.mubr.f32.gmra.mrb[0].mxu0 %v540
  %v607 = vpop.f32.mrb[0].mxu0
  %v608 = vadd.f32 0.0, %v607
  %v609 = vpop.f32.mrb[0].mxu0
  %610 = vdwg.mxu0
  %v611 = vadd.f32 %v151, %v608
  %v612 = vtanh.pop %v611
  %613 = vmatprep.subr.mxu0 0.0
  %614 = vmatpush1.msra.mxu0 %v164
  %615 = vmatprep.subr.mxu0 0.0
  %616 = vmatpush1.msra.mxu0 %v165
  %617 = vmatprep.subr.mxu0 0.0
  %618 = vmatpush1.msra.mxu0 %v166
  %619 = vmatprep.subr.mxu0 0.0
  %620 = vmatpush1.msra.mxu0 %v167
  %621 = vmatprep.subr.mxu0 0.0
  %622 = vmatpush1.msra.mxu0 %v168
  %623 = vmatprep.subr.mxu0 0.0
  %624 = vmatpush1.msra.mxu0 %v169
  %625 = vmatprep.subr.mxu0 0.0
  %626 = vmatpush1.msra.mxu0 %v170
  %627 = vmatprep.subr.mxu0 0.0
  %628 = vmatpush1.msra.mxu0 %v171
  %629 = vmatprep.subr.mxu0 0.0
  %630 = vmatpush1.msra.mxu0 %v172
  %631 = vmatprep.subr.mxu0 0.0
  %632 = vmatpush1.msra.mxu0 %v173
  %633 = vmatprep.subr.mxu0 0.0
  %634 = vmatpush1.msra.mxu0 %v174
  %635 = vmatprep.subr.mxu0 0.0
  %636 = vmatpush1.msra.mxu0 %v175
  %637 = vmatprep.subr.mxu0 0.0
  %638 = vmatpush1.msra.mxu0 %v176
  %639 = vmatprep.subr.mxu0 0.0
  %640 = vmatpush1.msra.mxu0 %v177
  %641 = vmatprep.subr.mxu0 0.0
  %642 = vmatpush1.msra.mxu0 %v178
  %643 = vmatprep.subr.mxu0 0.0
  %644 = vmatpush1.msra.mxu0 %v179
  %645 = vmatprep.subr.mxu0 0.0
  %646 = vmatpush1.msra.mxu0 0.0
  %647 = vmatprep.subr.mxu0 0.0
  %648 = vmatpush1.msra.mxu0 0.0
  %649 = vmatprep.subr.mxu0 0.0
  %650 = vmatpush1.msra.mxu0 0.0
  %651 = vmatprep.subr.mxu0 0.0
  %652 = vmatpush1.msra.mxu0 0.0
  %653 = vmatprep.subr.mxu0 0.0
  %654 = vmatpush1.msra.mxu0 0.0
  %655 = vmatprep.subr.mxu0 0.0
  %656 = vmatpush1.msra.mxu0 0.0
  %657 = vmatprep.subr.mxu0 0.0
  %658 = vmatpush1.msra.mxu0 0.0
  %659 = vmatprep.subr.mxu0 0.0
  %660 = vmatpush1.msra.mxu0 0.0
  %661 = vmatprep.subr.mxu0 0.0
  %662 = vmatpush1.msra.mxu0 0.0
  %663 = vmatprep.subr.mxu0 0.0
  %664 = vmatpush1.msra.mxu0 0.0
  %665 = vmatprep.subr.mxu0 0.0
  %666 = vmatpush1.msra.mxu0 0.0
  %667 = vmatprep.subr.mxu0 0.0
  %668 = vmatpush1.msra.mxu0 0.0
  %669 = vmatprep.subr.mxu0 0.0
  %670 = vmatpush1.msra.mxu0 0.0
  %671 = vmatprep.subr.mxu0 0.0
  %672 = vmatpush1.msra.mxu0 0.0
  %673 = vmatprep.subr.mxu0 0.0
  %674 = vmatpush1.msra.mxu0 0.0
  %675 = vmatprep.subr.mxu0 0.0
  %676 = vmatpush1.msra.mxu0 0.0
  %677 = vmatprep.mubr.f32.mxu0 0.0
  %678 = vmatmul.mubr.f32.gmra.mrb[0].mxu0 %v612
  %v679 = vpop.f32.mrb[0].mxu0
  %v680 = vadd.f32 0.0, %v679
  %v681 = vpop.f32.mrb[0].mxu0
  %682 = vdwg.mxu0
  %v683 = vadd.f32 %v156, %v680
  %v684 = vtanh.pop %v683
  %685 = vmatprep.subr.mxu0 0.0
  %686 = vmatpush1.msra.mxu0 %v164
  %687 = vmatprep.subr.mxu0 0.0
  %688 = vmatpush1.msra.mxu0 %v165
  %689 = vmatprep.subr.mxu0 0.0
  %690 = vmatpush1.msra.mxu0 %v166
  %691 = vmatprep.subr.mxu0 0.0
  %692 = vmatpush1.msra.mxu0 %v167
  %693 = vmatprep.subr.mxu0 0.0
  %694 = vmatpush1.msra.mxu0 %v168
  %695 = vmatprep.subr.mxu0 0.0
  %696 = vmatpush1.msra.mxu0 %v169
  %697 = vmatprep.subr.mxu0 0.0
  %698 = vmatpush1.msra.mxu0 %v170
  %699 = vmatprep.subr.mxu0 0.0
  %700 = vmatpush1.msra.mxu0 %v171
  %701 = vmatprep.subr.mxu0 0.0
  %702 = vmatpush1.msra.mxu0 %v172
  %703 = vmatprep.subr.mxu0 0.0
  %704 = vmatpush1.msra.mxu0 %v173
  %705 = vmatprep.subr.mxu0 0.0
  %706 = vmatpush1.msra.mxu0 %v174
  %707 = vmatprep.subr.mxu0 0.0
  %708 = vmatpush1.msra.mxu0 %v175
  %709 = vmatprep.subr.mxu0 0.0
  %710 = vmatpush1.msra.mxu0 %v176
  %711 = vmatprep.subr.mxu0 0.0
  %712 = vmatpush1.msra.mxu0 %v177
  %713 = vmatprep.subr.mxu0 0.0
  %714 = vmatpush1.msra.mxu0 %v178
  %715 = vmatprep.subr.mxu0 0.0
  %716 = vmatpush1.msra.mxu0 %v179
  %717 = vmatprep.subr.mxu0 0.0
  %718 = vmatpush1.msra.mxu0 0.0
  %719 = vmatprep.subr.mxu0 0.0
  %720 = vmatpush1.msra.mxu0 0.0
  %721 = vmatprep.subr.mxu0 0.0
  %722 = vmatpush1.msra.mxu0 0.0
  %723 = vmatprep.subr.mxu0 0.0
  %724 = vmatpush1.msra.mxu0 0.0
  %725 = vmatprep.subr.mxu0 0.0
  %726 = vmatpush1.msra.mxu0 0.0
  %727 = vmatprep.subr.mxu0 0.0
  %728 = vmatpush1.msra.mxu0 0.0
  %729 = vmatprep.subr.mxu0 0.0
  %730 = vmatpush1.msra.mxu0 0.0
  %731 = vmatprep.subr.mxu0 0.0
  %732 = vmatpush1.msra.mxu0 0.0
  %733 = vmatprep.subr.mxu0 0.0
  %734 = vmatpush1.msra.mxu0 0.0
  %735 = vmatprep.subr.mxu0 0.0
  %736 = vmatpush1.msra.mxu0 0.0
  %737 = vmatprep.subr.mxu0 0.0
  %738 = vmatpush1.msra.mxu0 0.0
  %739 = vmatprep.subr.mxu0 0.0
  %740 = vmatpush1.msra.mxu0 0.0
  %741 = vmatprep.subr.mxu0 0.0
  %742 = vmatpush1.msra.mxu0 0.0
  %743 = vmatprep.subr.mxu0 0.0
  %744 = vmatpush1.msra.mxu0 0.0
  %745 = vmatprep.subr.mxu0 0.0
  %746 = vmatpush1.msra.mxu0 0.0
  %747 = vmatprep.subr.mxu0 0.0
  %748 = vmatpush1.msra.mxu0 0.0
  %749 = vmatprep.mubr.f32.mxu0 0.0
  %750 = vmatmul.mubr.f32.gmra.mrb[0].mxu0 %v684
  %v751 = vpop.f32.mrb[0].mxu0
  %v752 = vadd.f32 0.0, %v751
  %v753 = vpop.f32.mrb[0].mxu0
  %754 = vdwg.mxu0
  %v755 = vadd.f32 %v161, %v752
  %v756 = vtanh.pop %v755
  %757 = vst [vmem:[%s8] sm:$0xff] %v756
  %v758 = vld [vmem:[%s5] sm:$0xff]
  %v759 = vld [vmem:[%s5 + $0x8] sm:$0xff]
  %v760 = vld [vmem:[%s5 + $0x10] sm:$0xff]
  %v761 = vld [vmem:[%s5 + $0x18] sm:$0xff]
  %v762 = vld [vmem:[%s5 + $0x20] sm:$0xff]
  %v763 = vld [vmem:[%s5 + $0x28] sm:$0xff]
  %v764 = vld [vmem:[%s5 + $0x30] sm:$0xff]
  %v765 = vld [vmem:[%s5 + $0x38] sm:$0xff]
  %v766 = vld [vmem:[%s5 + $0x40] sm:$0xff]
  %v767 = vld [vmem:[%s5 + $0x48] sm:$0xff]
  %v768 = vld [vmem:[%s5 + $0x50] sm:$0xff]
  %v769 = vld [vmem:[%s5 + $0x58] sm:$0xff]
  %v770 = vld [vmem:[%s5 + $0x60] sm:$0xff]
  %v771 = vld [vmem:[%s5 + $0x68] sm:$0xff]
  %v772 = vld [vmem:[%s5 + $0x70] sm:$0xff]
  %v773 = vld [vmem:[%s5 + $0x78] sm:$0xff]
  %v774 = vld [vmem:[%s6] sm:$0x1]
  %v776 = vlaneseq
  %v777 = vshrl.u32 %v776, 7
  %v778 = vsub.s32 0, %v777
  %v779 = vrot.slane %v774, %v778
  %781 = vmatprep.subr.mxu0 0.0
  %782 = vmatpush1.msra.mxu0 %v758
  %783 = vmatprep.subr.mxu0 0.0
  %784 = vmatpush1.msra.mxu0 %v759
  %785 = vmatprep.subr.mxu0 0.0
  %786 = vmatpush1.msra.mxu0 %v760
  %787 = vmatprep.subr.mxu0 0.0
  %788 = vmatpush1.msra.mxu0 %v761
  %789 = vmatprep.subr.mxu0 0.0
  %790 = vmatpush1.msra.mxu0 %v762
  %791 = vmatprep.subr.mxu0 0.0
  %792 = vmatpush1.msra.mxu0 %v763
  %793 = vmatprep.subr.mxu0 0.0
  %794 = vmatpush1.msra.mxu0 %v764
  %795 = vmatprep.subr.mxu0 0.0
  %796 = vmatpush1.msra.mxu0 %v765
  %797 = vmatprep.subr.mxu0 0.0
  %798 = vmatpush1.msra.mxu0 %v766
  %799 = vmatprep.subr.mxu0 0.0
  %800 = vmatpush1.msra.mxu0 %v767
  %801 = vmatprep.subr.mxu0 0.0
  %802 = vmatpush1.msra.mxu0 %v768
  %803 = vmatprep.subr.mxu0 0.0
  %804 = vmatpush1.msra.mxu0 %v769
  %805 = vmatprep.subr.mxu0 0.0
  %806 = vmatpush1.msra.mxu0 %v770
  %807 = vmatprep.subr.mxu0 0.0
  %808 = vmatpush1.msra.mxu0 %v771
  %809 = vmatprep.subr.mxu0 0.0
  %810 = vmatpush1.msra.mxu0 %v772
  %811 = vmatprep.subr.mxu0 0.0
  %812 = vmatpush1.msra.mxu0 %v773
  %813 = vmatprep.subr.mxu0 0.0
  %814 = vmatpush1.msra.mxu0 0.0
  %815 = vmatprep.subr.mxu0 0.0
  %816 = vmatpush1.msra.mxu0 0.0
  %817 = vmatprep.subr.mxu0 0.0
  %818 = vmatpush1.msra.mxu0 0.0
  %819 = vmatprep.subr.mxu0 0.0
  %820 = vmatpush1.msra.mxu0 0.0
  %821 = vmatprep.subr.mxu0 0.0
  %822 = vmatpush1.msra.mxu0 0.0
  %823 = vmatprep.subr.mxu0 0.0
  %824 = vmatpush1.msra.mxu0 0.0
  %825 = vmatprep.subr.mxu0 0.0
  %826 = vmatpush1.msra.mxu0 0.0
  %827 = vmatprep.subr.mxu0 0.0
  %828 = vmatpush1.msra.mxu0 0.0
  %829 = vmatprep.subr.mxu0 0.0
  %830 = vmatpush1.msra.mxu0 0.0
  %831 = vmatprep.subr.mxu0 0.0
  %832 = vmatpush1.msra.mxu0 0.0
  %833 = vmatprep.subr.mxu0 0.0
  %834 = vmatpush1.msra.mxu0 0.0
  %835 = vmatprep.subr.mxu0 0.0
  %836 = vmatpush1.msra.mxu0 0.0
  %837 = vmatprep.subr.mxu0 0.0
  %838 = vmatpush1.msra.mxu0 0.0
  %839 = vmatprep.subr.mxu0 0.0
  %840 = vmatpush1.msra.mxu0 0.0
  %841 = vmatprep.subr.mxu0 0.0
  %842 = vmatpush1.msra.mxu0 0.0
  %843 = vmatprep.subr.mxu0 0.0
  %844 = vmatpush1.msra.mxu0 0.0
  %845 = vmatprep.mubr.f32.mxu0 0.0
  %846 = vmatmul.mubr.f32.gmra.mrb[0].mxu0 %v756
  %v847 = vpop.f32.mrb[0].mxu0
  %v848 = vadd.f32 %v779, %v847
  %v849 = vpop.f32.mrb[0].mxu0
  %850 = vdwg.mxu0
  %851 = vmax.xlane.f32.xlu0 %v848
  %v852 = vpop.xlane.xlu0 %851
  %v853 = vsub.f32 %v848, %v852
  %v854 = vmul.f32 %v853, 1.442695
  %v855 = vpow.pop %v854
  %856 = vadd.xlane.f32.xlu0 %v855
  %v857 = vpop.xlane.xlu0 %856
  %v858 = vlog2.pop %v857
  %v859 = vmul.f32 %v858, 0.6931472
  %v860 = vsub.f32 %v853, %v859
  %861 = vst [vmem:[%s7] sm:$0xff] %v860
  // Predicated region
  $region30: #{nn_rnn_forward.1} parent=0 // pred_check
    _
  $region31: #{nn_rnn_forward.1} parent=0 // pred_check_branch
    %863 = sbr.rel (0) target = $region33
  $region32: #{nn_rnn_forward.1} parent=0 // pred_region
    _
  $region33: #{nn_rnn_forward.1} parent=0 // pred_fallthru
    _
  // Predicated region
  $region34: #{nn_rnn_forward.1} parent=0 // pred_check
    _
  $region35: #{nn_rnn_forward.1} parent=0 // pred_check_branch
    %865 = sbr.rel (0) target = $region37
  $region36: #{nn_rnn_forward.1} parent=0 // pred_region
    _
  $region37: #{nn_rnn_forward.1} parent=0 // pred_fallthru
    _
  // Predicated region
  $region38: #{nn_rnn_forward.1} parent=0 // pred_check
    _
  $region39: #{nn_rnn_forward.1} parent=0 // pred_check_branch
    %867 = sbr.rel (0) target = $region41
  $region40: #{nn_rnn_forward.1} parent=0 // pred_region
    _
  $region41: #{nn_rnn_forward.1} parent=0 // pred_fallthru
    _
  // Predicated region
  $region42: #{nn_rnn_forward.1} parent=0 // pred_check
    _
  $region43: #{nn_rnn_forward.1} parent=0 // pred_check_branch
    %869 = sbr.rel (0) target = $region45
  $region44: #{nn_rnn_forward.1} parent=0 // pred_region
    _
  $region45: #{nn_rnn_forward.1} parent=0 // pred_fallthru
    _

</llo_original>
